<compile_context>
chip_gen: v7x
topology: tpu7x:2x2x1
jax: 0.10.0
libtpu: 0.0.40
codegen_flags: <defaults>
</compile_context>

<pallas_src>
import jax
import jax.numpy as jnp
from jax import lax
from jax.experimental import pallas as pl
from jax.experimental.pallas import tpu as pltpu


def _round_up(v, m):
    return ((v + m - 1) // m) * m


# ---------------------------------------------------------------------------
# Kernel 1: fused 9-tap matmul, NCHW-native:  (9*Cout, Cin) @ (Cin, HW_tile)
# ---------------------------------------------------------------------------
def _tap_matmul_kernel(w_ref, x_ref, o_ref):
    # bf16 x bf16 -> f32 on the MXU; spatial tile (multiple of 128) is the lane axis.
    o_ref[0] = jnp.dot(w_ref[...], x_ref[0], preferred_element_type=jnp.float32)


def _tap_matmul(x_bf, w_bf, tm):
    """x_bf: (N, Cin, HWp) bf16, w_bf: (KCp, Cin) bf16 -> (N, KCp, HWp) f32."""
    n, cin, hwp = x_bf.shape
    kcp = w_bf.shape[0]
    assert hwp % tm == 0

    # VMEM budget: double-buffered x / out blocks + resident weight.  Cap well below
    # 64 MiB (v7x physical) so the big-tile choice stays portable across chips.
    need = 2 * (cin * tm * 2 + kcp * tm * 4) + kcp * cin * 2
    vmem_limit = int(min(max(2 * need, 32 << 20), 48 << 20))

    return pl.pallas_call(
        _tap_matmul_kernel,
        out_shape=jax.ShapeDtypeStruct((n, kcp, hwp), jnp.float32),
        grid=(n, hwp // tm),
        in_specs=[
            pl.BlockSpec((kcp, cin), lambda b, t: (0, 0)),       # weight stays VMEM-resident
            pl.BlockSpec((1, cin, tm), lambda b, t: (b, 0, t)),
        ],
        out_specs=pl.BlockSpec((1, kcp, tm), lambda b, t: (b, 0, t)),
        compiler_params=pltpu.CompilerParams(
            dimension_semantics=("parallel", "parallel"),
            vmem_limit_bytes=vmem_limit,
        ),
    )(w_bf, x_bf)


# ---------------------------------------------------------------------------
# Kernel 2: bias add + channel concat (NCHW, flattened spatial on lanes)
# ---------------------------------------------------------------------------
def _bias_concat_kernel(conv_ref, skip_ref, bias_ref, o_ref):
    c = conv_ref.shape[1]
    # Two separate channel-range stores (no in-kernel concatenate of a non-aligned
    # block); the lane axis is the spatial tile, so both stores are lane-dense.
    o_ref[0, :c] = conv_ref[0] + bias_ref[...]    # bias (Cout, 1) broadcasts along lanes
    o_ref[0, c:] = skip_ref[0]


def _pick_hw_tile(hw, bytes_per_col, budget=4 << 20):
    """Largest 128-multiple divisor of hw whose block set fits the budget (else full hw)."""
    if hw % 128 == 0:
        for t in range(hw, 127, -128):
            if hw % t == 0 and t * bytes_per_col <= budget:
                return t
        return 128
    return hw  # full-dim block is always legal; only hit for odd spatial sizes


def _bias_concat(conv, skip, bias):
    n, cout, hs, ws = conv.shape
    cskip = skip.shape[1]
    ctot = cout + cskip
    hw = hs * ws
    t_hw = _pick_hw_tile(hw, (cout + cskip + ctot) * 4)
    out = pl.pallas_call(
        _bias_concat_kernel,
        out_shape=jax.ShapeDtypeStruct((n, ctot, hw), jnp.float32),
        grid=(n, hw // t_hw),
        in_specs=[
            pl.BlockSpec((1, cout, t_hw), lambda b, t: (b, 0, t)),
            pl.BlockSpec((1, cskip, t_hw), lambda b, t: (b, 0, t)),
            pl.BlockSpec((cout, 1), lambda b, t: (0, 0)),
        ],
        out_specs=pl.BlockSpec((1, ctot, t_hw), lambda b, t: (b, 0, t)),
        compiler_params=pltpu.CompilerParams(
            dimension_semantics=("parallel", "parallel")),
    )(conv.reshape(n, cout, hw), skip.reshape(n, cskip, hw), bias.reshape(cout, 1))
    return out.reshape(n, ctot, hs, ws)


# ---------------------------------------------------------------------------
# TransitionUp forward: NCHW in / NCHW out (matches the PyTorch module)
# ---------------------------------------------------------------------------
def transition_up(x, skip, weight, bias, *, tm=512):
    """x: (N, Cin, H, W); skip: (N, Cskip, Hs, Ws);
    weight: (Cin, Cout, 3, 3) (PyTorch ConvTranspose2d layout); bias: (Cout,)."""
    n, cin, h, w = x.shape
    _, cskip, hs, ws = skip.shape
    cout = weight.shape[1]
    kk = weight.shape[2]
    kc = kk * kk * cout
    kcp = _round_up(kc, 8)          # sublane-friendly number of tap-channel rows
    hw = h * w

    # NCHW-native operands, bf16 streams (free reshape of trailing dims, no transposes).
    x_bf = x.astype(jnp.bfloat16).reshape(n, cin, hw)
    w_t = jnp.transpose(weight, (2, 3, 1, 0)).reshape(kc, cin)   # rows ordered (kh, kw, co)
    if kcp != kc:
        w_t = jnp.pad(w_t, ((0, kcp - kc), (0, 0)))
    w_bf = w_t.astype(jnp.bfloat16)

    # Spatial tile: tunable, multiple of 128, clamped to the (padded) problem size.
    tm_eff = max(128, (min(tm, _round_up(hw, 128)) // 128) * 128)
    hwp = _round_up(hw, tm_eff)
    if hwp != hw:
        x_bf = jnp.pad(x_bf, ((0, 0), (0, 0), (0, hwp - hw)))

    # Hot path: one fused 9-tap matmul on the MXU (Pallas kernel 1).
    y = _tap_matmul(x_bf, w_bf, tm_eff)                 # (N, KCp, HWp) f32
    y = y[:, :kc, :hw].reshape(n, kk, kk, cout, h, w)   # strip pad rows/cols (zeros)

    # Parity-phase reconstruction of the transposed conv (replaces 9 canvas scatter-adds).
    # Output pixel (2i+p, 2j+q) = sum of taps (kh, kw) with kh%2==p, kw%2==q, shifted.
    # TODO(synk): strided row/col interleave + crop stays as an XLA elementwise fusion;
    # expressing the alternating-phase gather as a BlockSpec index_map is not clean.
    def tap(kh, kw):
        return y[:, kh, kw]                              # (N, Cout, H, W)

    def shift(a, down, right):
        # Pad to (H+1, W+1) so padded[i, j] == a[i-down, j-right] (zero if out of range).
        return jnp.pad(a, ((0, 0), (0, 0), (down, 1 - down), (right, 1 - right)))

    ph00 = (shift(tap(0, 0), 0, 0) + shift(tap(2, 0), 1, 0)
            + shift(tap(0, 2), 0, 1) + shift(tap(2, 2), 1, 1))
    ph01 = shift(tap(0, 1), 0, 0) + shift(tap(2, 1), 1, 0)
    ph10 = shift(tap(1, 0), 0, 0) + shift(tap(1, 2), 0, 1)
    ph11 = shift(tap(1, 1), 0, 0)

    # Interleave phases into the canvas (row 2H+1 / col 2W+1 are synthetic and cropped away).
    row_even = jnp.stack([ph00, ph01], axis=-1)          # (N, Cout, H+1, W+1, 2)
    row_odd = jnp.stack([ph10, ph11], axis=-1)
    canvas = jnp.stack([row_even, row_odd], axis=3)      # (N, Cout, H+1, 2, W+1, 2)
    canvas = canvas.reshape(n, cout, 2 * (h + 1), 2 * (w + 1))

    # center_crop (same arithmetic as the PyTorch helper; true canvas size is (2H+1, 2W+1)).
    hout = (h - 1) * 2 + kk
    wout = (w - 1) * 2 + kk
    top = (hout - hs) // 2
    left = (wout - ws) // 2
    conv = canvas[:, :, top:top + hs, left:left + ws]

    # Bias add + concat([conv, skip], channel) in Pallas kernel 2 (NCHW-native).
    return _bias_concat(conv, skip.astype(jnp.float32), bias.astype(jnp.float32))


# ---------------------------------------------------------------------------
# Reference (pure JAX): ConvTranspose2d == dilated conv with flipped kernel.
# Inputs are bf16-rounded exactly like the kernel path, so only f32 summation
# order differs between the two implementations.
# ---------------------------------------------------------------------------
def _reference(x, skip, weight, bias):
    n, cin, h, w = x.shape
    _, cskip, hs, ws = skip.shape
    kk = weight.shape[2]
    xq = x.astype(jnp.bfloat16).astype(jnp.float32)
    wq = weight.astype(jnp.bfloat16).astype(jnp.float32)
    w_conv = jnp.transpose(jnp.flip(wq, axis=(2, 3)), (1, 0, 2, 3))  # (Cout, Cin, kh, kw)
    full = lax.conv_general_dilated(
        xq, w_conv,
        window_strides=(1, 1),
        padding=[(kk - 1, kk - 1), (kk - 1, kk - 1)],
        lhs_dilation=(2, 2),
        dimension_numbers=("NCHW", "OIHW", "NCHW"),
        precision=lax.Precision.HIGHEST,
    ) + bias.astype(jnp.float32)[None, :, None, None]
    hout = (h - 1) * 2 + kk
    wout = (w - 1) * 2 + kk
    top = (hout - hs) // 2
    left = (wout - ws) // 2
    crop = full[:, :, top:top + hs, left:left + ws]
    return jnp.concatenate([crop, skip.astype(jnp.float32)], axis=1)


if __name__ == "__main__":
    key = jax.random.PRNGKey(0)
    k1, k2, k3, k4 = jax.random.split(key, 4)

    N, CIN, COUT, CSKIP = 2, 4, 4, 6
    H = W = 8
    HS = WS = 16  # skip spatial size (conv-transpose output 17x17 center-cropped to 16x16)

    x = jax.random.normal(k1, (N, CIN, H, W), jnp.float32)
    skip = jax.random.normal(k2, (N, CSKIP, HS, WS), jnp.float32)
    weight = jax.random.normal(k3, (CIN, COUT, 3, 3), jnp.float32) * 0.1   # ConvTranspose2d weight
    bias = jax.random.normal(k4, (COUT,), jnp.float32) * 0.1               # ConvTranspose2d bias

    out = jax.block_until_ready(transition_up(x, skip, weight, bias))
    ref = jax.block_until_ready(_reference(x, skip, weight, bias))

    assert out.shape == (N, COUT + CSKIP, HS, WS), out.shape
    err = float(jnp.max(jnp.abs(out - ref)))
    assert jnp.allclose(out, ref, atol=1e-4, rtol=1e-4), err

    print("KERNEL_OK")
</pallas_src>

<mosaic_0001>
module attributes {stable_mosaic.version = 11 : i64} {
  func.func @_tap_matmul_kernel(%arg0: i32, %arg1: i32, %arg2: memref<40x4xbf16, #tpu.memory_space<vmem>>, %arg3: memref<1x4x128xbf16, #tpu.memory_space<vmem>>, %arg4: memref<1x40x128xf32, #tpu.memory_space<vmem>>) attributes {dimension_semantics = [#tpu.dimension_semantics<parallel>, #tpu.dimension_semantics<parallel>], iteration_bounds = array<i64: 2, 1>, scalar_prefetch = 0 : i64, scratch_operands = 0 : i64, tpu.core_type = #tpu.core_type<tc>, window_params = [{pipeline_mode = #tpu.pipeline_mode<synchronous>, transform_indices = @transform_0, window_bounds = array<i64: 40, 4>}, {transform_indices = @transform_1, window_bounds = array<i64: 1, 4, 128>}, {transform_indices = @transform_2, window_bounds = array<i64: 1, 40, 128>}]} {
    %c0 = arith.constant 0 : index
    %c0_0 = arith.constant 0 : index
    %0 = vector.load %arg2[%c0, %c0_0] : memref<40x4xbf16, #tpu.memory_space<vmem>>, vector<40x4xbf16>
    %c0_1 = arith.constant 0 : index
    %c0_2 = arith.constant 0 : index
    %c0_3 = arith.constant 0 : index
    %1 = vector.load %arg3[%c0_1, %c0_2, %c0_3] : memref<1x4x128xbf16, #tpu.memory_space<vmem>>, vector<1x4x128xbf16>
    %2 = vector.shape_cast %1 : vector<1x4x128xbf16> to vector<4x128xbf16>
    %cst = arith.constant dense<0.000000e+00> : vector<40x128xf32>
    %3 = tpu.matmul %0, %2, %cst {dimension_numbers = #tpu.dot_dimension_numbers<[1], [0], [0], [1], [0, 0, 1, 1], [], []>} : vector<40x4xbf16>, vector<4x128xbf16>, vector<40x128xf32> -> vector<40x128xf32>
    %c0_4 = arith.constant 0 : index
    %c0_5 = arith.constant 0 : index
    %c0_6 = arith.constant 0 : index
    %4 = vector.load %arg4[%c0_4, %c0_5, %c0_6] : memref<1x40x128xf32, #tpu.memory_space<vmem>>, vector<1x40x128xf32>
    %5 = vector.shape_cast %4 : vector<1x40x128xf32> to vector<40x128xf32>
    %6 = vector.shape_cast %3 : vector<40x128xf32> to vector<1x40x128xf32>
    tpu.vector_store %arg4[%c0_4, %c0_5, %c0_6], %6 {strides = array<i32>} : memref<1x40x128xf32, #tpu.memory_space<vmem>>, vector<1x40x128xf32>,
    return
  }
  func.func @transform_0(%arg0: i32, %arg1: i32) -> (i32, i32) {
    %c0_i32 = arith.constant 0 : i32
    %c0_i32_0 = arith.constant 0 : i32
    %c0_i32_1 = arith.constant 0 : i32
    return %c0_i32, %c0_i32_0 : i32, i32
  }
  func.func @transform_1(%arg0: i32, %arg1: i32) -> (i32, i32, i32) {
    %c0_i32 = arith.constant 0 : i32
    %c0_i32_0 = arith.constant 0 : i32
    return %arg0, %c0_i32, %arg1 : i32, i32, i32
  }
  func.func @transform_2(%arg0: i32, %arg1: i32) -> (i32, i32, i32) {
    %c0_i32 = arith.constant 0 : i32
    %c0_i32_0 = arith.constant 0 : i32
    return %arg0, %c0_i32, %arg1 : i32, i32, i32
  }
}

</mosaic_0001>

<llo_original>
// kernel: tpu_custom_call.1
$region0: #{tpu_custom_call.1}
  #allocation0 [shape = 'u32[]', space=smem, size = 0x4, offset = 0x4, fixed_abs, tag = 'smem constant byte address 0x4 - core index']
  #allocation1 [shape = 'u32[144,128]{1,0:T(1,128)}', space=vmem, size = 0x12000, scoped, tag = 'internal scratch']
  %s0 = inlined_call_operand.vmem [shape: bf16[40,4], index: 0, kind: input, shape index: {}]
  %s1 = inlined_call_operand.vmem [shape: bf16[2,4,128], index: 1, kind: input, shape index: {}]
  %s2 = inlined_call_operand.hbm [shape: f32[2,40,128], index: 2, kind: output, shape index: {}]
  %s3 = sld [smem:[#allocation0]]
  $region41: #{tpu_custom_call.1} parent=0
    _
  %s5 = ssub.s32 1, %s3
  %s6 = scalar_select 0, %s5, %s3
  $region1: #{tpu_custom_call.1} parent=0
    #allocation2 [shape = 'u8[40960]{0}', space=vmem, size = 0xa000, scoped, tag = 'output window, operand 0']
    #allocation3 [shape = 's32[2]{0}', space=sflag, size = 0x8, scoped, tag = 'scoped memory for tpu_custom_call.1']
    %7 = vsyncpa [#allocation3], 0
    %s8 = scalar_lea.sflag [#allocation3], 1
    %9 = vsyncpa %s8, 0
    loop: start=0, step=1, limit=4
    $region2: #{tpu_custom_call.1} parent=1 // loop_pre_header
      _
    $region3: #{tpu_custom_call.1} parent=1 // loop_header
      %s11 = sphi 0, %s15
      %p12 = scmp.ge.s32.totalorder %s11, 4
      %s18 = sphi 0, %s30
      %s19 = sphi 0, %s26
      %s20 = sphi 0, %s18
      %s21 = sphi 0, %s19
      %s22 = sphi 0, %s20
      %s23 = sphi 0, %s21
      %s31 = sphi 0, %s31
      %s33 = sphi 0, %s31
      %s34 = sphi 0, %s33
      %s48 = sphi 0, %s34
      %s56 = sphi 0, %s58
      %s59 = sphi 0, %s56
      %s60 = sphi 0, %s59
      %s76 = sphi 0, %s60
      %s84 = sphi 0, %s86
      %s87 = sphi 0, %s84
      %s88 = sphi 0, %s87
      %s104 = sphi 0, %s88
    $region4: #{tpu_custom_call.1} parent=1 // loop_header_branch
      %14 = sbr.rel (%p12) target = $region8
    $region5: #{tpu_custom_call.1} parent=1 // loop_body
      %s16 = ssub.s32 %s11, 1
      %s17 = ssub.s32 %s11, 2
      %s24 = sadd.s32 1, %s19
      %p25 = scmp.ge.s32.totalorder %s24, 1
      %s26 = scalar_select %p25, 0, %s24
      %s27 = sadd.s32 1, %s18
      %s28 = scalar_select %p25, %s27, %s18
      %p29 = scmp.ge.s32.totalorder %s28, 2
      %s30 = scalar_select %p29, 0, %s28
      %s32 = sadd.s32 %s31, 1
      %p35 = scmp.eq.s32.totalorder %s11, 1
      %p36 = scmp.ne.s32.totalorder %s31, %s33
      %p37 = scmp.eq.s32.totalorder %s11, 0
      %p38 = por %p36, %p37
      %p39 = scmp.ne.s32.totalorder %s31, %s33
      %p40 = scmp.eq.s32.totalorder %s16, 1
      %p41 = por %p39, %p40
      %p42 = scmp.ne.s32.totalorder %s33, %s34
      %p43 = scmp.eq.s32.totalorder %s16, 0
      %p44 = por %p42, %p43
      %p45 = scmp.ne.s32.totalorder %s33, %s34
      %p46 = scmp.eq.s32.totalorder %s17, 1
      %p47 = por %p45, %p46
      %p49 = scmp.ne.s32.totalorder %s34, %s48
      %p50 = scmp.eq.s32.totalorder %s17, 0
      %p51 = por %p49, %p50
      %s52 = ssub.s32 %s18, %s30
      %s53 = ssub.s32 %s19, %s26
      %s54 = sor.u32 %s52, %s53
      %p55 = scmp.eq.s32.totalorder %s54, 0
      %s57 = sadd.s32 %s56, 1
      %s58 = scalar_select %p55, %s56, %s57
      %p61 = pneg %p55
      %p62 = scmp.eq.s32.totalorder %s11, 1
      %p63 = por %p61, %p62
      %p64 = scmp.ne.s32.totalorder %s56, %s59
      %p65 = scmp.eq.s32.totalorder %s11, 0
      %p66 = por %p64, %p65
      %p67 = scmp.ne.s32.totalorder %s56, %s59
      %p68 = scmp.eq.s32.totalorder %s16, 1
      %p69 = por %p67, %p68
      %p70 = scmp.ne.s32.totalorder %s59, %s60
      %p71 = scmp.eq.s32.totalorder %s16, 0
      %p72 = por %p70, %p71
      %p73 = scmp.ne.s32.totalorder %s59, %s60
      %p74 = scmp.eq.s32.totalorder %s17, 1
      %p75 = por %p73, %p74
      %p77 = scmp.ne.s32.totalorder %s60, %s76
      %p78 = scmp.eq.s32.totalorder %s17, 0
      %p79 = por %p77, %p78
      %s80 = ssub.s32 %s18, %s30
      %s81 = ssub.s32 %s19, %s26
      %s82 = sor.u32 %s80, %s81
      %p83 = scmp.eq.s32.totalorder %s82, 0
      %s85 = sadd.s32 %s84, 1
      %s86 = scalar_select %p83, %s84, %s85
      %p89 = pneg %p83
      %p90 = scmp.eq.s32.totalorder %s11, 1
      %p91 = por %p89, %p90
      %p92 = scmp.ne.s32.totalorder %s84, %s87
      %p93 = scmp.eq.s32.totalorder %s11, 0
      %p94 = por %p92, %p93
      %p95 = scmp.ne.s32.totalorder %s84, %s87
      %p96 = scmp.eq.s32.totalorder %s16, 1
      %p97 = por %p95, %p96
      %p98 = scmp.ne.s32.totalorder %s87, %s88
      %p99 = scmp.eq.s32.totalorder %s16, 0
      %p100 = por %p98, %p99
      %p101 = scmp.ne.s32.totalorder %s87, %s88
      %p102 = scmp.eq.s32.totalorder %s17, 1
      %p103 = por %p101, %p102
      %p105 = scmp.ne.s32.totalorder %s88, %s104
      %p106 = scmp.eq.s32.totalorder %s17, 0
      %p107 = por %p105, %p106
      %p108 = scmp.le.s32.totalorder 1, %s11
      %p109 = scmp.lt.s32.totalorder %s11, 3
      %p110 = pnand %p108, %p109
      %p111 = pneg %p110
      // Predicated region
      $region9: #{tpu_custom_call.1} parent=5 // pred_check
        _
      $region10: #{tpu_custom_call.1} parent=5 // pred_check_branch
        %113 = sbr.rel (%p110) target = $region12
      $region11: #{tpu_custom_call.1} parent=5 // pred_region
        %s114 = ssub.s32 %s11, 1
        // Predicated region
        $region13: #{tpu_custom_call.1} parent=11 // pred_check
          %p115 = pneg %p44
        $region14: #{tpu_custom_call.1} parent=11 // pred_check_branch
          %117 = sbr.rel (%p115) target = $region16
        $region15: #{tpu_custom_call.1} parent=11 // pred_region
          _
        $region16: #{tpu_custom_call.1} parent=11 // pred_fallthru
          _
      $region12: #{tpu_custom_call.1} parent=5 // pred_fallthru
        _
      %p118 = scmp.lt.s32.totalorder %s11, 2
      // Predicated region
      $region17: #{tpu_custom_call.1} parent=5 // pred_check
        %p119 = pneg %p118
      $region18: #{tpu_custom_call.1} parent=5 // pred_check_branch
        %121 = sbr.rel (%p119) target = $region20
      $region19: #{tpu_custom_call.1} parent=5 // pred_region
        // Predicated region
        $region21: #{tpu_custom_call.1} parent=19 // pred_check
          %p122 = pneg %p66
        $region22: #{tpu_custom_call.1} parent=19 // pred_check_branch
          %124 = sbr.rel (%p122) target = $region24
        $region23: #{tpu_custom_call.1} parent=19 // pred_region
          %p125 = scmp.lt.s32.totalorder %s18, 1
          %s126 = scalar_select %p125, %s18, 1
          %p127 = scmp.lt.s32.totalorder %s19, 0
          %s128 = scalar_select %p127, %s19, 0
          %s129 = sadd.s32 %s128, %s126
          %s130 = smul.addr %s129, 2
          %s131 = scalar_lea.vmem %s1, %s130
        $region24: #{tpu_custom_call.1} parent=19 // pred_fallthru
          _
      $region20: #{tpu_custom_call.1} parent=5 // pred_fallthru
        _
      %p132 = scmp.le.s32.totalorder 1, %s11
      %p133 = scmp.lt.s32.totalorder %s11, 3
      %p134 = pnand %p132, %p133
      %p135 = pneg %p134
      // Predicated region
      $region25: #{tpu_custom_call.1} parent=5 // pred_check
        _
      $region26: #{tpu_custom_call.1} parent=5 // pred_check_branch
        %137 = sbr.rel (%p134) target = $region28
      $region27: #{tpu_custom_call.1} parent=5 // pred_region
        %s138 = ssub.s32 %s11, 1
        %p139 = pneg %p44
        %p140 = pneg %p41
        %p141 = scmp.lt.s32.totalorder %s20, 1
        %s142 = scalar_select %p141, %s20, 1
        %p143 = scmp.lt.s32.totalorder %s21, 0
        %s144 = scalar_select %p143, %s21, 0
        %s145 = sadd.s32 %s144, %s142
        %s146 = smul.addr %s145, 2
        %s147 = scalar_lea.vmem %s1, %s146
        %p148 = pneg %p72
        %p149 = pneg %p69
        %p150 = pneg %p100
        %p151 = pneg %p97
        %s152 = sand.u32 %s87, 1
        %s153 = scalar_lea.sflag [#allocation3], %s152
        %s154 = sand.u32 %s87, 1
        %s155 = smul.addr %s154, 40
        %s156 = scalar_lea.vmem [#allocation2], %s155
        %p157 = scmp.lt.s32.totalorder %s20, 1
        %s158 = scalar_select %p157, %s20, 1
        %p159 = scmp.lt.s32.totalorder %s21, 0
        %s160 = scalar_select %p159, %s21, 0
        %s161 = sadd.s32 %s160, %s158
        %s162 = smul.addr %s161, 2
        %s163 = scalar_lea.vmem %s1, %s162
        %v165 = vld [vmem:[%s0] sm:$0xf]
        %v166 = vld [vmem:[%s0 + $0x4] sm:$0xf]
        %v167 = vld [vmem:[%s0 + $0x8] sm:$0xf]
        %v168 = vld [vmem:[%s0 + $0xc] sm:$0xf]
        %v169 = vld [vmem:[%s0 + $0x10] sm:$0xf]
        %v170 = vld [vmem:[%s163] sm:$0x3]
        %v176 = vunpack.c.l.b16 %v165
        %v177 = vunpack.c.l.b16 %v166
        %v178 = vunpack.c.l.b16 %v167
        %v179 = vunpack.c.l.b16 %v168
        %v180 = vunpack.c.l.b16 %v169
        %v181 = vpack.c.b16 %v177, %v176
        %v182 = vpack.c.b16 %v179, %v178
        %v183 = vpack.c.b16 %v180, %v180
        %vm184 = vcmask 31744
        %v186 = vsel %vm184, %v181, 0
        %v189 = vsel %vm184, %v182, 0
        %v192 = vsel %vm184, %v183, 0
        %vm194 = vcmask 1041408
        %v196 = vsel %vm194, %v170, 0
        %198 = vmatprep.subr.bf16.mxu0 0
        %199 = vmatpush1.bf16.msra.mxu0 %v196
        %200 = vmatprep.subr.bf16.mxu0 0
        %201 = vmatpush1.bf16.msra.mxu0 0
        %202 = vmatprep.subr.bf16.mxu0 0
        %203 = vmatpush1.bf16.msra.mxu0 0
        %204 = vmatprep.subr.bf16.mxu0 0
        %205 = vmatpush1.bf16.msra.mxu0 0
        %206 = vmatprep.subr.bf16.mxu0 0
        %207 = vmatpush1.bf16.msra.mxu0 0
        %208 = vmatprep.subr.bf16.mxu0 0
        %209 = vmatpush1.bf16.msra.mxu0 0
        %210 = vmatprep.subr.bf16.mxu0 0
        %211 = vmatpush1.bf16.msra.mxu0 0
        %212 = vmatprep.subr.bf16.mxu0 0
        %213 = vmatpush1.bf16.msra.mxu0 0
        %214 = vmatprep.subr.bf16.mxu0 0
        %215 = vmatpush1.bf16.msra.mxu0 0
        %216 = vmatprep.subr.bf16.mxu0 0
        %217 = vmatpush1.bf16.msra.mxu0 0
        %218 = vmatprep.subr.bf16.mxu0 0
        %219 = vmatpush1.bf16.msra.mxu0 0
        %220 = vmatprep.subr.bf16.mxu0 0
        %221 = vmatpush1.bf16.msra.mxu0 0
        %222 = vmatprep.subr.bf16.mxu0 0
        %223 = vmatpush1.bf16.msra.mxu0 0
        %224 = vmatprep.subr.bf16.mxu0 0
        %225 = vmatpush1.bf16.msra.mxu0 0
        %226 = vmatprep.subr.bf16.mxu0 0
        %227 = vmatpush1.bf16.msra.mxu0 0
        %228 = vmatprep.subr.bf16.mxu0 0
        %229 = vmatpush1.bf16.msra.mxu0 0
        %230 = vmatprep.mubr.bf16.mxu0 0
        %231 = vmatmul.mubr.bf16.gmra.mrb[0].mxu0 %v186
        %v232 = vpop.f32.mrb[0].mxu0
        %v233 = vadd.f32 0.0, %v232
        %v234 = vpop.f32.mrb[0].mxu0
        %v235 = vpop.f32.mrb[0].mxu0
        %v236 = vadd.f32 0.0, %v235
        %v237 = vpop.f32.mrb[0].mxu0
        %238 = vmatprep.mubr.bf16.mxu0 0
        %239 = vmatmul.mubr.bf16.gmra.mrb[0].mxu0 %v189
        %v240 = vpop.f32.mrb[0].mxu0
        %v241 = vadd.f32 0.0, %v240
        %v242 = vpop.f32.mrb[0].mxu0
        %v243 = vpop.f32.mrb[0].mxu0
        %v244 = vadd.f32 0.0, %v243
        %v245 = vpop.f32.mrb[0].mxu0
        %246 = vmatprep.mubr.bf16.mxu0 0
        %247 = vmatmul.mubr.bf16.gmra.mrb[0].mxu0 %v192
        %v248 = vpop.f32.mrb[0].mxu0
        %v249 = vadd.f32 0.0, %v248
        %v250 = vpop.f32.mrb[0].mxu0
        %v251 = vpop.f32.mrb[0].mxu0
        %v252 = vpop.f32.mrb[0].mxu0
        %253 = vdwg.mxu0
        %254 = vst [vmem:[%s156] sm:$0xff] %v233
        %255 = vst [vmem:[%s156 + $0x8] sm:$0xff] %v236
        %256 = vst [vmem:[%s156 + $0x10] sm:$0xff] %v241
        %257 = vst [vmem:[%s156 + $0x18] sm:$0xff] %v244
        %258 = vst [vmem:[%s156 + $0x20] sm:$0xff] %v249
        %s259 = sand.u32 %s87, 1
        %s260 = scalar_lea.sflag [#allocation3], %s259
        %s261 = sand.u32 %s87, 1
        %s262 = smul.addr %s261, 40
        %s263 = scalar_lea.vmem [#allocation2], %s262
        // Predicated region
        $region29: #{tpu_custom_call.1} parent=27 // pred_check
          %p264 = pneg %p97
        $region30: #{tpu_custom_call.1} parent=27 // pred_check_branch
          %266 = sbr.rel (%p264) target = $region32
        $region31: #{tpu_custom_call.1} parent=27 // pred_region
          %s268 = ssub.s32 640, 640
          %269 = vsyncadd %s260, %s268
          %s270 = smul.addr %s20, 5
          %s271 = sadd.s32 %s21, %s270
          %s272 = smul.addr %s271, 128
          %s273 = scalar_lea.hbm %s2, %s272
          %s274 = sshll.u32 %s263, 4
          %s275 = int_to_ptr.vmem [resolvable:$true] %s274
          %280 = dma.vmem_to_hbm [thread:$0]  %s275, 640, %s273, %s260, 128, 128, 8
        $region32: #{tpu_custom_call.1} parent=27 // pred_fallthru
          _
      $region28: #{tpu_custom_call.1} parent=5 // pred_fallthru
        _
      %p281 = scmp.le.s32.totalorder 2, %s11
      // Predicated region
      $region33: #{tpu_custom_call.1} parent=5 // pred_check
        %p282 = pneg %p281
      $region34: #{tpu_custom_call.1} parent=5 // pred_check_branch
        %284 = sbr.rel (%p282) target = $region36
      $region35: #{tpu_custom_call.1} parent=5 // pred_region
        %s285 = ssub.s32 %s11, 2
        // Predicated region
        $region37: #{tpu_custom_call.1} parent=35 // pred_check
          %p286 = pneg %p103
        $region38: #{tpu_custom_call.1} parent=35 // pred_check_branch
          %288 = sbr.rel (%p286) target = $region40
        $region39: #{tpu_custom_call.1} parent=35 // pred_region
          %s289 = sand.u32 %s88, 1
          %s290 = scalar_lea.sflag [#allocation3], %s289
          %s291 = sand.u32 %s88, 1
          %s292 = smul.addr %s291, 40
          %s293 = scalar_lea.vmem [#allocation2], %s292
          %294 = dma.done %s290, 640
        $region40: #{tpu_custom_call.1} parent=35 // pred_fallthru
          _
      $region36: #{tpu_custom_call.1} parent=5 // pred_fallthru
        _
    $region6: #{tpu_custom_call.1} parent=1 // loop_footer
      %s15 = sadd.s32 1, %s11
    $region7: #{tpu_custom_call.1} parent=1 // loop_footer_branch
      %10 = sbr.rel target = $region3
    $region8: #{tpu_custom_call.1} parent=1 // loop_exit
      _
    %295 = vsyncpa [#allocation3], 1
    %s296 = scalar_lea.sflag [#allocation3], 1
    %297 = vsyncpa %s296, 1

</llo_original>
